<compile_context>
chip_gen: v7x
topology: tpu7x:2x2x1
jax: 0.10.0
libtpu: 0.0.40
codegen_flags: <defaults>
</compile_context>

<pallas_src>
import functools

import jax
import jax.numpy as jnp
from jax import lax
from jax.experimental import pallas as pl
from jax.experimental.pallas import tpu as pltpu

D, H, Z, V = 32, 128, 32, 32      # module-fixed sizes
OUT_LANES = 128                   # packed lane-dense output: Q|K|V|pad


def ema_kernel(l_ref, x_ref, wtop_ref, wbot_ref, off_ref, o_ref, carry_ref):
    """One N-tile: carried prefix-sum (MXU) + fused l_z/l_v/affine epilogue."""
    @pl.when(pl.program_id(0) == 0)
    def _init():
        carry_ref[...] = jnp.zeros_like(carry_ref)

    x = x_ref[...]                                             # (tn, D) f32
    carry = carry_ref[...]                                     # (1, D)

    # Inclusive prefix sum along rows: cumsum = carry + L @ x   (MXU)
    c = carry + jnp.dot(l_ref[...], x, preferred_element_type=jnp.float32)
    # Running row-sum for the next N-tile.
    carry_ref[...] = carry + jnp.sum(x, axis=0, keepdims=True)

    # [Q | K | V | 0] in a single lane-dense (tn, 128) store.
    o_ref[...] = (jnp.dot(c, wtop_ref[...], preferred_element_type=jnp.float32)
                  + jnp.dot(x, wbot_ref[...], preferred_element_type=jnp.float32)
                  + off_ref[...])


def pack_params(params):
    """Exact reparameterization done once outside the kernel: fold the EMA
    weight sum_h(beta*mu), k_q/k_k and the biases into two (D, 128) weight
    slabs and one (1, 128) offset."""
    beta, mu, wz, bz, kq, muq, kk, muk, wv, bv = params
    w_d = jnp.sum(beta * mu, axis=-1)                          # (D,)
    wz_eff = w_d[:, None] * wz                                 # fold EMA into l_z

    wtop = jnp.zeros((D, OUT_LANES), jnp.float32)
    wtop = wtop.at[:, 0:Z].set(wz_eff * kq)                    # Q columns
    wtop = wtop.at[:, Z:2 * Z].set(wz_eff * kk)                # K columns

    wbot = jnp.zeros((D, OUT_LANES), jnp.float32)
    wbot = wbot.at[:, 2 * Z:2 * Z + V].set(wv)                 # V columns

    off = jnp.zeros((1, OUT_LANES), jnp.float32)
    off = off.at[:, 0:Z].set(bz * kq + muq)
    off = off.at[:, Z:2 * Z].set(bz * kk + muk)
    off = off.at[:, 2 * Z:2 * Z + V].set(bv)
    return wtop, wbot, off


@functools.partial(jax.jit, static_argnames=("tile_n",))
def ema_layer(x, params, *, tile_n=512):
    n = x.shape[0]
    wtop, wbot, off = pack_params(params)

    # N-tiled 1-D grid; rows per tile are a multiple of 8 (sublane tiling).
    tn = max(8, (min(tile_n, pl.cdiv(n, 8) * 8) // 8) * 8)
    n_pad = pl.cdiv(n, tn) * tn
    if n_pad != n:
        x = jnp.pad(x, ((0, n_pad - n), (0, 0)))   # zero rows: carry unaffected
    lower = jnp.tril(jnp.ones((tn, tn), jnp.float32))          # prefix-sum matrix

    out = pl.pallas_call(
        ema_kernel,
        out_shape=jax.ShapeDtypeStruct((n_pad, OUT_LANES), jnp.float32),
        grid=(n_pad // tn,),
        in_specs=[
            pl.BlockSpec((tn, tn), lambda i: (0, 0)),          # L        (resident)
            pl.BlockSpec((tn, D), lambda i: (i, 0)),           # x tile   (pipelined)
            pl.BlockSpec((D, OUT_LANES), lambda i: (0, 0)),    # Wtop     (resident)
            pl.BlockSpec((D, OUT_LANES), lambda i: (0, 0)),    # Wbot     (resident)
            pl.BlockSpec((1, OUT_LANES), lambda i: (0, 0)),    # offset   (resident)
        ],
        out_specs=pl.BlockSpec((tn, OUT_LANES), lambda i: (i, 0)),
        scratch_shapes=[pltpu.VMEM((1, D), jnp.float32)],      # cumsum carry
        compiler_params=pltpu.CompilerParams(
            dimension_semantics=("arbitrary",)),               # sequential carry
    )(lower, x, wtop, wbot, off)

    q = out[:n, 0:Z]
    k = out[:n, Z:2 * Z]
    v = out[:n, 2 * Z:2 * Z + V]
    return q, k, v


def ema_ref(x, params):
    """Pure-JAX reference mirroring the PyTorch forward (original params)."""
    beta, mu, wz, bz, kq, muq, kk, muk, wv, bv = params
    hp = lax.Precision.HIGHEST
    xp = jnp.einsum('nd,dh->ndh', x, beta)
    xi = jnp.cumsum(xp, axis=0)                                # linear_ema
    x_i = jnp.einsum('ndh,dh->nd', xi, mu, precision=hp)
    z = jnp.dot(x_i, wz, precision=hp) + bz
    q = z * kq + muq
    k = z * kk + muk
    v = jnp.dot(x, wv, precision=hp) + bv
    return q, k, v


def init_params(key):
    ks = jax.random.split(key, 10)
    beta = 0.1 * jax.random.normal(ks[0], (D, H), jnp.float32)
    mu = 0.1 * jax.random.normal(ks[1], (D, H), jnp.float32)
    # l_z: Linear(D -> Z); PyTorch-style uniform(+-1/sqrt(in)); pre-transposed.
    bz_lim = 1.0 / (D ** 0.5)
    wz = jax.random.uniform(ks[2], (D, Z), jnp.float32, -bz_lim, bz_lim)
    bz = jax.random.uniform(ks[3], (1, Z), jnp.float32, -bz_lim, bz_lim)
    # l_v: Linear(Z -> V); pre-transposed (applied to x since D == Z).
    bv_lim = 1.0 / (Z ** 0.5)
    wv = jax.random.uniform(ks[4], (Z, V), jnp.float32, -bv_lim, bv_lim)
    bv = jax.random.uniform(ks[5], (1, V), jnp.float32, -bv_lim, bv_lim)
    kq = jax.random.normal(ks[6], (1, Z), jnp.float32)
    muq = jax.random.normal(ks[7], (1, Z), jnp.float32)
    kk = jax.random.normal(ks[8], (1, Z), jnp.float32)
    muk = jax.random.normal(ks[9], (1, Z), jnp.float32)
    return (beta, mu, wz, bz, kq, muq, kk, muk, wv, bv)


if __name__ == "__main__":
    key = jax.random.PRNGKey(0)
    kx, kp, kx2 = jax.random.split(key, 3)
    params = init_params(kp)

    # Small shape consistent with the module: seq N=8, feature D=32.
    x = jax.random.normal(kx, (8, D), jnp.float32)
    q, k, v = jax.block_until_ready(ema_layer(x, params))
    q_r, k_r, v_r = ema_ref(x, params)

    # Tolerance sized for the worst case where the MXU runs the kernel's f32
    # matmuls at default (bf16-pass) precision; when both paths run at full f32
    # precision the observed mismatch is ~1e-6.
    tol = dict(rtol=5e-3, atol=5e-3)
    assert jnp.allclose(q, q_r, **tol)
    assert jnp.allclose(k, k_r, **tol)
    assert jnp.allclose(v, v_r, **tol)

    # Multi-tile path: exercises the carried cumsum across sequential grid
    # steps (N=40, tile_n=16 -> 3 N-tiles + zero padding).
    x2 = jax.random.normal(kx2, (40, D), jnp.float32)
    q2, k2, v2 = jax.block_until_ready(ema_layer(x2, params, tile_n=16))
    q2_r, k2_r, v2_r = ema_ref(x2, params)
    assert jnp.allclose(q2, q2_r, **tol)
    assert jnp.allclose(k2, k2_r, **tol)
    assert jnp.allclose(v2, v2_r, **tol)

    print("KERNEL_OK")
</pallas_src>

<mosaic_0001>
module attributes {stable_mosaic.version = 11 : i64} {
  func.func @ema_kernel(%arg0: i32, %arg1: memref<8x8xf32, #tpu.memory_space<vmem>>, %arg2: memref<8x32xf32, #tpu.memory_space<vmem>>, %arg3: memref<32x128xf32, #tpu.memory_space<vmem>>, %arg4: memref<32x128xf32, #tpu.memory_space<vmem>>, %arg5: memref<1x128xf32, #tpu.memory_space<vmem>>, %arg6: memref<8x128xf32, #tpu.memory_space<vmem>>, %arg7: memref<1x32xf32, #tpu.memory_space<vmem>>) attributes {dimension_semantics = [#tpu.dimension_semantics<arbitrary>], iteration_bounds = array<i64: 1>, scalar_prefetch = 0 : i64, scratch_operands = 1 : i64, tpu.core_type = #tpu.core_type<tc>, window_params = [{pipeline_mode = #tpu.pipeline_mode<synchronous>, transform_indices = @transform_0, window_bounds = array<i64: 8, 8>}, {transform_indices = @transform_1, window_bounds = array<i64: 8, 32>}, {pipeline_mode = #tpu.pipeline_mode<synchronous>, transform_indices = @transform_2, window_bounds = array<i64: 32, 128>}, {pipeline_mode = #tpu.pipeline_mode<synchronous>, transform_indices = @transform_3, window_bounds = array<i64: 32, 128>}, {pipeline_mode = #tpu.pipeline_mode<synchronous>, transform_indices = @transform_4, window_bounds = array<i64: 1, 128>}, {transform_indices = @transform_5, window_bounds = array<i64: 8, 128>}]} {
    %c0_i32 = arith.constant 0 : i32
    %0 = arith.cmpi eq, %arg0, %c0_i32 : i32
    %1 = arith.extui %0 : i1 to i32
    %c0_i32_0 = arith.constant 0 : i32
    %2 = arith.cmpi ne, %1, %c0_i32_0 : i32
    scf.if %2 {
      %cst_19 = arith.constant 0.000000e+00 : f32
      %22 = vector.broadcast %cst_19 : f32 to vector<1x32xf32>
      %c0_20 = arith.constant 0 : index
      %c0_21 = arith.constant 0 : index
      %23 = vector.load %arg7[%c0_20, %c0_21] : memref<1x32xf32, #tpu.memory_space<vmem>>, vector<1x32xf32>
      tpu.vector_store %arg7[%c0_20, %c0_21], %22 {strides = array<i32>} : memref<1x32xf32, #tpu.memory_space<vmem>>, vector<1x32xf32>,
    } else {
    }
    %c0 = arith.constant 0 : index
    %c0_1 = arith.constant 0 : index
    %3 = vector.load %arg2[%c0, %c0_1] : memref<8x32xf32, #tpu.memory_space<vmem>>, vector<8x32xf32>
    %c0_2 = arith.constant 0 : index
    %c0_3 = arith.constant 0 : index
    %4 = vector.load %arg7[%c0_2, %c0_3] : memref<1x32xf32, #tpu.memory_space<vmem>>, vector<1x32xf32>
    %c0_4 = arith.constant 0 : index
    %c0_5 = arith.constant 0 : index
    %5 = vector.load %arg1[%c0_4, %c0_5] : memref<8x8xf32, #tpu.memory_space<vmem>>, vector<8x8xf32>
    %cst = arith.constant dense<0.000000e+00> : vector<8x32xf32>
    %6 = tpu.matmul %5, %3, %cst {dimension_numbers = #tpu.dot_dimension_numbers<[1], [0], [0], [1], [0, 0, 1, 1], [], []>} : vector<8x8xf32>, vector<8x32xf32>, vector<8x32xf32> -> vector<8x32xf32>
    %7 = vector.broadcast %4 : vector<1x32xf32> to vector<8x32xf32>
    %8 = arith.addf %7, %6 : vector<8x32xf32>
    %cst_6 = arith.constant dense<0.000000e+00> : vector<32xf32>
    %9 = vector.multi_reduction <add>, %3, %cst_6 [0] : vector<8x32xf32> to vector<32xf32>
    %10 = vector.shape_cast %9 : vector<32xf32> to vector<1x32xf32>
    %11 = arith.addf %4, %10 : vector<1x32xf32>
    %c0_7 = arith.constant 0 : index
    %c0_8 = arith.constant 0 : index
    %12 = vector.load %arg7[%c0_7, %c0_8] : memref<1x32xf32, #tpu.memory_space<vmem>>, vector<1x32xf32>
    tpu.vector_store %arg7[%c0_7, %c0_8], %11 {strides = array<i32>} : memref<1x32xf32, #tpu.memory_space<vmem>>, vector<1x32xf32>,
    %c0_9 = arith.constant 0 : index
    %c0_10 = arith.constant 0 : index
    %13 = vector.load %arg3[%c0_9, %c0_10] : memref<32x128xf32, #tpu.memory_space<vmem>>, vector<32x128xf32>
    %cst_11 = arith.constant dense<0.000000e+00> : vector<8x128xf32>
    %14 = tpu.matmul %8, %13, %cst_11 {dimension_numbers = #tpu.dot_dimension_numbers<[1], [0], [0], [1], [0, 0, 1, 1], [], []>} : vector<8x32xf32>, vector<32x128xf32>, vector<8x128xf32> -> vector<8x128xf32>
    %c0_12 = arith.constant 0 : index
    %c0_13 = arith.constant 0 : index
    %15 = vector.load %arg4[%c0_12, %c0_13] : memref<32x128xf32, #tpu.memory_space<vmem>>, vector<32x128xf32>
    %cst_14 = arith.constant dense<0.000000e+00> : vector<8x128xf32>
    %16 = tpu.matmul %3, %15, %cst_14 {dimension_numbers = #tpu.dot_dimension_numbers<[1], [0], [0], [1], [0, 0, 1, 1], [], []>} : vector<8x32xf32>, vector<32x128xf32>, vector<8x128xf32> -> vector<8x128xf32>
    %17 = arith.addf %14, %16 : vector<8x128xf32>
    %c0_15 = arith.constant 0 : index
    %c0_16 = arith.constant 0 : index
    %18 = vector.load %arg5[%c0_15, %c0_16] : memref<1x128xf32, #tpu.memory_space<vmem>>, vector<1x128xf32>
    %19 = vector.broadcast %18 : vector<1x128xf32> to vector<8x128xf32>
    %20 = arith.addf %17, %19 : vector<8x128xf32>
    %c0_17 = arith.constant 0 : index
    %c0_18 = arith.constant 0 : index
    %21 = vector.load %arg6[%c0_17, %c0_18] : memref<8x128xf32, #tpu.memory_space<vmem>>, vector<8x128xf32>
    tpu.vector_store %arg6[%c0_17, %c0_18], %20 {strides = array<i32>} : memref<8x128xf32, #tpu.memory_space<vmem>>, vector<8x128xf32>,
    return
  }
  func.func @transform_0(%arg0: i32) -> (i32, i32) {
    %c0_i32 = arith.constant 0 : i32
    %c0_i32_0 = arith.constant 0 : i32
    %c0_i32_1 = arith.constant 0 : i32
    return %c0_i32, %c0_i32_0 : i32, i32
  }
  func.func @transform_1(%arg0: i32) -> (i32, i32) {
    %c0_i32 = arith.constant 0 : i32
    %c0_i32_0 = arith.constant 0 : i32
    return %arg0, %c0_i32 : i32, i32
  }
  func.func @transform_2(%arg0: i32) -> (i32, i32) {
    %c0_i32 = arith.constant 0 : i32
    %c0_i32_0 = arith.constant 0 : i32
    %c0_i32_1 = arith.constant 0 : i32
    return %c0_i32, %c0_i32_0 : i32, i32
  }
  func.func @transform_3(%arg0: i32) -> (i32, i32) {
    %c0_i32 = arith.constant 0 : i32
    %c0_i32_0 = arith.constant 0 : i32
    %c0_i32_1 = arith.constant 0 : i32
    return %c0_i32, %c0_i32_0 : i32, i32
  }
  func.func @transform_4(%arg0: i32) -> (i32, i32) {
    %c0_i32 = arith.constant 0 : i32
    %c0_i32_0 = arith.constant 0 : i32
    %c0_i32_1 = arith.constant 0 : i32
    return %c0_i32, %c0_i32_0 : i32, i32
  }
  func.func @transform_5(%arg0: i32) -> (i32, i32) {
    %c0_i32 = arith.constant 0 : i32
    %c0_i32_0 = arith.constant 0 : i32
    return %arg0, %c0_i32 : i32, i32
  }
}

</mosaic_0001>

<llo_original>
// kernel: ema_layer.1
$region0: #{ema_layer.1}
  #allocation0 [shape = 'u32[]', space=smem, size = 0x4, offset = 0x4, fixed_abs, tag = 'smem constant byte address 0x4 - core index']
  #allocation1 [shape = 'u32[144,128]{1,0:T(1,128)}', space=vmem, size = 0x12000, scoped, tag = 'internal scratch']
  #allocation2 [shape = 'f32[1,32]{1,0:T(1,128)}', space=vmem, size = 0x200, scoped, tag = 'scratch operand']
  %s0 = inlined_call_operand.vmem [shape: f32[8,8], index: 0, kind: input, shape index: {}]
  %s1 = inlined_call_operand.vmem [shape: f32[8,32], index: 1, kind: input, shape index: {}]
  %s2 = inlined_call_operand.vmem [shape: f32[32,128], index: 2, kind: input, shape index: {}]
  %s3 = inlined_call_operand.vmem [shape: f32[32,128], index: 3, kind: input, shape index: {}]
  %s4 = inlined_call_operand.vmem [shape: f32[1,128], index: 4, kind: input, shape index: {}]
  %s5 = inlined_call_operand.vmem [shape: f32[8,128], index: 5, kind: output, shape index: {}]
  %s6 = sld [smem:[#allocation0]]
  $region34: #{ema_layer.1} parent=0
    _
  %s8 = ssub.s32 1, %s6
  %s9 = scalar_select 0, %s8, %s6
  // Predicated region
  $region2: #{ema_layer.1} parent=0 // pred_check
    _
  $region3: #{ema_layer.1} parent=0 // pred_check_branch
    %11 = sbr.rel (0) target = $region5
  $region4: #{ema_layer.1} parent=0 // pred_region
    _
  $region5: #{ema_layer.1} parent=0 // pred_fallthru
    _
  // Predicated region
  $region6: #{ema_layer.1} parent=0 // pred_check
    _
  $region7: #{ema_layer.1} parent=0 // pred_check_branch
    %13 = sbr.rel (0) target = $region9
  $region8: #{ema_layer.1} parent=0 // pred_region
    _
  $region9: #{ema_layer.1} parent=0 // pred_fallthru
    _
  // Predicated region
  $region10: #{ema_layer.1} parent=0 // pred_check
    _
  $region11: #{ema_layer.1} parent=0 // pred_check_branch
    %15 = sbr.rel (0) target = $region13
  $region12: #{ema_layer.1} parent=0 // pred_region
    _
  $region13: #{ema_layer.1} parent=0 // pred_fallthru
    _
  // Predicated region
  $region14: #{ema_layer.1} parent=0 // pred_check
    _
  $region15: #{ema_layer.1} parent=0 // pred_check_branch
    %17 = sbr.rel (0) target = $region17
  $region16: #{ema_layer.1} parent=0 // pred_region
    _
  $region17: #{ema_layer.1} parent=0 // pred_fallthru
    _
  // Predicated region
  $region18: #{ema_layer.1} parent=0 // pred_check
    _
  $region19: #{ema_layer.1} parent=0 // pred_check_branch
    %19 = sbr.rel (0) target = $region21
  $region20: #{ema_layer.1} parent=0 // pred_region
    _
  $region21: #{ema_layer.1} parent=0 // pred_fallthru
    _
  %p20 = scmp.eq.s32.totalorder 0, 0
  // Predicated region
  $region22: #{ema_layer.1} parent=0 // pred_check
    %p21 = pneg %p20
  $region23: #{ema_layer.1} parent=0 // pred_check_branch
    %23 = sbr.rel (%p21) target = $region25
  $region24: #{ema_layer.1} parent=0 // pred_region
    %vm24 = vcmask 253952
    %25 = vst.msk [vmem:[#allocation2] sm:$0x1] %vm24, 0.0
  $region25: #{ema_layer.1} parent=0 // pred_fallthru
    _
  %v26 = vld [vmem:[%s1] sm:$0xff]
  %v27 = vld [vmem:[#allocation2] sm:$0x1]
  %v28 = vld [vmem:[%s0] sm:$0xff]
  %vm29 = vcmask 64512
  %v31 = vsel %vm29, %v28, 0
  %33 = vmatprep.subr.mxu0 0.0
  %34 = vmatpush1.msra.mxu0 %v26
  %35 = vmatprep.subr.mxu0 0.0
  %36 = vmatpush1.msra.mxu0 0.0
  %37 = vmatprep.subr.mxu0 0.0
  %38 = vmatpush1.msra.mxu0 0.0
  %39 = vmatprep.subr.mxu0 0.0
  %40 = vmatpush1.msra.mxu0 0.0
  %41 = vmatprep.subr.mxu0 0.0
  %42 = vmatpush1.msra.mxu0 0.0
  %43 = vmatprep.subr.mxu0 0.0
  %44 = vmatpush1.msra.mxu0 0.0
  %45 = vmatprep.subr.mxu0 0.0
  %46 = vmatpush1.msra.mxu0 0.0
  %47 = vmatprep.subr.mxu0 0.0
  %48 = vmatpush1.msra.mxu0 0.0
  %49 = vmatprep.subr.mxu0 0.0
  %50 = vmatpush1.msra.mxu0 0.0
  %51 = vmatprep.subr.mxu0 0.0
  %52 = vmatpush1.msra.mxu0 0.0
  %53 = vmatprep.subr.mxu0 0.0
  %54 = vmatpush1.msra.mxu0 0.0
  %55 = vmatprep.subr.mxu0 0.0
  %56 = vmatpush1.msra.mxu0 0.0
  %57 = vmatprep.subr.mxu0 0.0
  %58 = vmatpush1.msra.mxu0 0.0
  %59 = vmatprep.subr.mxu0 0.0
  %60 = vmatpush1.msra.mxu0 0.0
  %61 = vmatprep.subr.mxu0 0.0
  %62 = vmatpush1.msra.mxu0 0.0
  %63 = vmatprep.subr.mxu0 0.0
  %64 = vmatpush1.msra.mxu0 0.0
  %65 = vmatprep.subr.mxu0 0.0
  %66 = vmatpush1.msra.mxu0 0.0
  %67 = vmatprep.subr.mxu0 0.0
  %68 = vmatpush1.msra.mxu0 0.0
  %69 = vmatprep.subr.mxu0 0.0
  %70 = vmatpush1.msra.mxu0 0.0
  %71 = vmatprep.subr.mxu0 0.0
  %72 = vmatpush1.msra.mxu0 0.0
  %73 = vmatprep.subr.mxu0 0.0
  %74 = vmatpush1.msra.mxu0 0.0
  %75 = vmatprep.subr.mxu0 0.0
  %76 = vmatpush1.msra.mxu0 0.0
  %77 = vmatprep.subr.mxu0 0.0
  %78 = vmatpush1.msra.mxu0 0.0
  %79 = vmatprep.subr.mxu0 0.0
  %80 = vmatpush1.msra.mxu0 0.0
  %81 = vmatprep.subr.mxu0 0.0
  %82 = vmatpush1.msra.mxu0 0.0
  %83 = vmatprep.subr.mxu0 0.0
  %84 = vmatpush1.msra.mxu0 0.0
  %85 = vmatprep.subr.mxu0 0.0
  %86 = vmatpush1.msra.mxu0 0.0
  %87 = vmatprep.subr.mxu0 0.0
  %88 = vmatpush1.msra.mxu0 0.0
  %89 = vmatprep.subr.mxu0 0.0
  %90 = vmatpush1.msra.mxu0 0.0
  %91 = vmatprep.subr.mxu0 0.0
  %92 = vmatpush1.msra.mxu0 0.0
  %93 = vmatprep.subr.mxu0 0.0
  %94 = vmatpush1.msra.mxu0 0.0
  %95 = vmatprep.subr.mxu0 0.0
  %96 = vmatpush1.msra.mxu0 0.0
  %97 = vmatprep.mubr.f32.mxu0 0.0
  %98 = vmatmul.mubr.f32.gmra.mrb[0].mxu0 %v31
  %v99 = vpop.f32.mrb[0].mxu0
  %v100 = vadd.f32 0.0, %v99
  %v101 = vpop.f32.mrb[0].mxu0
  %102 = vdwg.mxu0
  %v104 = vlaneseq
  %v105 = vshrl.u32 %v104, 7
  %v106 = vsub.s32 0, %v105
  %v107 = vrot.slane %v27, %v106
  %v109 = vadd.f32 %v107, %v100
  %vm110 = vcmask 261120
  %v111 = vsel %vm110, %v26, 0.0
  %v112 = vrot.slane %v111, 4
  %v113 = vadd.f32 %v111, %v112
  %v114 = vrot.slane %v113, 2
  %v115 = vadd.f32 %v113, %v114
  %v116 = vrot.slane %v115, 1
  %v117 = vadd.f32 %v115, %v116
  %v118 = vadd.f32 %v27, %v117
  %vm119 = vcmask 253952
  %120 = vst.msk [vmem:[#allocation2] sm:$0x1] %vm119, %v118
  %v121 = vld [vmem:[%s2] sm:$0xff]
  %v122 = vld [vmem:[%s2 + $0x8] sm:$0xff]
  %v123 = vld [vmem:[%s2 + $0x10] sm:$0xff]
  %v124 = vld [vmem:[%s2 + $0x18] sm:$0xff]
  %v125 = vld [vmem:[%s3] sm:$0xff]
  %v126 = vld [vmem:[%s3 + $0x8] sm:$0xff]
  %v127 = vld [vmem:[%s3 + $0x10] sm:$0xff]
  %v128 = vld [vmem:[%s3 + $0x18] sm:$0xff]
  %v130 = vsel %vm110, %v26, 0
  %132 = vmatprep.subr.mxu0 0.0
  %133 = vmatpush1.msra.mxu0 %v125
  %134 = vmatprep.subr.mxu0 0.0
  %135 = vmatpush1.msra.mxu0 %v126
  %136 = vmatprep.subr.mxu0 0.0
  %137 = vmatpush1.msra.mxu0 %v127
  %138 = vmatprep.subr.mxu0 0.0
  %139 = vmatpush1.msra.mxu0 %v128
  %140 = vmatprep.subr.mxu0 0.0
  %141 = vmatpush1.msra.mxu0 0.0
  %142 = vmatprep.subr.mxu0 0.0
  %143 = vmatpush1.msra.mxu0 0.0
  %144 = vmatprep.subr.mxu0 0.0
  %145 = vmatpush1.msra.mxu0 0.0
  %146 = vmatprep.subr.mxu0 0.0
  %147 = vmatpush1.msra.mxu0 0.0
  %148 = vmatprep.subr.mxu0 0.0
  %149 = vmatpush1.msra.mxu0 0.0
  %150 = vmatprep.subr.mxu0 0.0
  %151 = vmatpush1.msra.mxu0 0.0
  %152 = vmatprep.subr.mxu0 0.0
  %153 = vmatpush1.msra.mxu0 0.0
  %154 = vmatprep.subr.mxu0 0.0
  %155 = vmatpush1.msra.mxu0 0.0
  %156 = vmatprep.subr.mxu0 0.0
  %157 = vmatpush1.msra.mxu0 0.0
  %158 = vmatprep.subr.mxu0 0.0
  %159 = vmatpush1.msra.mxu0 0.0
  %160 = vmatprep.subr.mxu0 0.0
  %161 = vmatpush1.msra.mxu0 0.0
  %162 = vmatprep.subr.mxu0 0.0
  %163 = vmatpush1.msra.mxu0 0.0
  %164 = vmatprep.subr.mxu0 0.0
  %165 = vmatpush1.msra.mxu0 0.0
  %166 = vmatprep.subr.mxu0 0.0
  %167 = vmatpush1.msra.mxu0 0.0
  %168 = vmatprep.subr.mxu0 0.0
  %169 = vmatpush1.msra.mxu0 0.0
  %170 = vmatprep.subr.mxu0 0.0
  %171 = vmatpush1.msra.mxu0 0.0
  %172 = vmatprep.subr.mxu0 0.0
  %173 = vmatpush1.msra.mxu0 0.0
  %174 = vmatprep.subr.mxu0 0.0
  %175 = vmatpush1.msra.mxu0 0.0
  %176 = vmatprep.subr.mxu0 0.0
  %177 = vmatpush1.msra.mxu0 0.0
  %178 = vmatprep.subr.mxu0 0.0
  %179 = vmatpush1.msra.mxu0 0.0
  %180 = vmatprep.subr.mxu0 0.0
  %181 = vmatpush1.msra.mxu0 0.0
  %182 = vmatprep.subr.mxu0 0.0
  %183 = vmatpush1.msra.mxu0 0.0
  %184 = vmatprep.subr.mxu0 0.0
  %185 = vmatpush1.msra.mxu0 0.0
  %186 = vmatprep.subr.mxu0 0.0
  %187 = vmatpush1.msra.mxu0 0.0
  %188 = vmatprep.subr.mxu0 0.0
  %189 = vmatpush1.msra.mxu0 0.0
  %190 = vmatprep.subr.mxu0 0.0
  %191 = vmatpush1.msra.mxu0 0.0
  %192 = vmatprep.subr.mxu0 0.0
  %193 = vmatpush1.msra.mxu0 0.0
  %194 = vmatprep.subr.mxu0 0.0
  %195 = vmatpush1.msra.mxu0 0.0
  %196 = vmatprep.mubr.f32.mxu0 0.0
  %197 = vmatmul.mubr.f32.gmra.mrb[0].mxu0 %v130
  %v198 = vpop.f32.mrb[0].mxu0
  %v199 = vadd.f32 0.0, %v198
  %v200 = vpop.f32.mrb[0].mxu0
  %201 = vdwg.mxu0
  %v203 = vsel %vm110, %v109, 0
  %205 = vmatprep.subr.mxu0 0.0
  %206 = vmatpush1.msra.mxu0 %v121
  %207 = vmatprep.subr.mxu0 0.0
  %208 = vmatpush1.msra.mxu0 %v122
  %209 = vmatprep.subr.mxu0 0.0
  %210 = vmatpush1.msra.mxu0 %v123
  %211 = vmatprep.subr.mxu0 0.0
  %212 = vmatpush1.msra.mxu0 %v124
  %213 = vmatprep.subr.mxu0 0.0
  %214 = vmatpush1.msra.mxu0 0.0
  %215 = vmatprep.subr.mxu0 0.0
  %216 = vmatpush1.msra.mxu0 0.0
  %217 = vmatprep.subr.mxu0 0.0
  %218 = vmatpush1.msra.mxu0 0.0
  %219 = vmatprep.subr.mxu0 0.0
  %220 = vmatpush1.msra.mxu0 0.0
  %221 = vmatprep.subr.mxu0 0.0
  %222 = vmatpush1.msra.mxu0 0.0
  %223 = vmatprep.subr.mxu0 0.0
  %224 = vmatpush1.msra.mxu0 0.0
  %225 = vmatprep.subr.mxu0 0.0
  %226 = vmatpush1.msra.mxu0 0.0
  %227 = vmatprep.subr.mxu0 0.0
  %228 = vmatpush1.msra.mxu0 0.0
  %229 = vmatprep.subr.mxu0 0.0
  %230 = vmatpush1.msra.mxu0 0.0
  %231 = vmatprep.subr.mxu0 0.0
  %232 = vmatpush1.msra.mxu0 0.0
  %233 = vmatprep.subr.mxu0 0.0
  %234 = vmatpush1.msra.mxu0 0.0
  %235 = vmatprep.subr.mxu0 0.0
  %236 = vmatpush1.msra.mxu0 0.0
  %237 = vmatprep.subr.mxu0 0.0
  %238 = vmatpush1.msra.mxu0 0.0
  %239 = vmatprep.subr.mxu0 0.0
  %240 = vmatpush1.msra.mxu0 0.0
  %241 = vmatprep.subr.mxu0 0.0
  %242 = vmatpush1.msra.mxu0 0.0
  %243 = vmatprep.subr.mxu0 0.0
  %244 = vmatpush1.msra.mxu0 0.0
  %245 = vmatprep.subr.mxu0 0.0
  %246 = vmatpush1.msra.mxu0 0.0
  %247 = vmatprep.subr.mxu0 0.0
  %248 = vmatpush1.msra.mxu0 0.0
  %249 = vmatprep.subr.mxu0 0.0
  %250 = vmatpush1.msra.mxu0 0.0
  %251 = vmatprep.subr.mxu0 0.0
  %252 = vmatpush1.msra.mxu0 0.0
  %253 = vmatprep.subr.mxu0 0.0
  %254 = vmatpush1.msra.mxu0 0.0
  %255 = vmatprep.subr.mxu0 0.0
  %256 = vmatpush1.msra.mxu0 0.0
  %257 = vmatprep.subr.mxu0 0.0
  %258 = vmatpush1.msra.mxu0 0.0
  %259 = vmatprep.subr.mxu0 0.0
  %260 = vmatpush1.msra.mxu0 0.0
  %261 = vmatprep.subr.mxu0 0.0
  %262 = vmatpush1.msra.mxu0 0.0
  %263 = vmatprep.subr.mxu0 0.0
  %264 = vmatpush1.msra.mxu0 0.0
  %265 = vmatprep.subr.mxu0 0.0
  %266 = vmatpush1.msra.mxu0 0.0
  %267 = vmatprep.subr.mxu0 0.0
  %268 = vmatpush1.msra.mxu0 0.0
  %269 = vmatprep.mubr.f32.mxu0 0.0
  %270 = vmatmul.mubr.f32.gmra.mrb[0].mxu0 %v203
  %v271 = vpop.f32.mrb[0].mxu0
  %v272 = vadd.f32 %v199, %v271
  %v273 = vpop.f32.mrb[0].mxu0
  %274 = vdwg.mxu0
  %v275 = vld [vmem:[%s4] sm:$0x1]
  %v277 = vlaneseq
  %v278 = vshrl.u32 %v277, 7
  %v279 = vsub.s32 0, %v278
  %v280 = vrot.slane %v275, %v279
  %v282 = vadd.f32 %v272, %v280
  %283 = vst [vmem:[%s5] sm:$0xff] %v282
  // Predicated region
  $region26: #{ema_layer.1} parent=0 // pred_check
    _
  $region27: #{ema_layer.1} parent=0 // pred_check_branch
    %285 = sbr.rel (0) target = $region29
  $region28: #{ema_layer.1} parent=0 // pred_region
    _
  $region29: #{ema_layer.1} parent=0 // pred_fallthru
    _
  // Predicated region
  $region30: #{ema_layer.1} parent=0 // pred_check
    _
  $region31: #{ema_layer.1} parent=0 // pred_check_branch
    %287 = sbr.rel (0) target = $region33
  $region32: #{ema_layer.1} parent=0 // pred_region
    _
  $region33: #{ema_layer.1} parent=0 // pred_fallthru
    _

</llo_original>
